<compile_context>
chip_gen: v7x
topology: tpu7x:2x2x1
jax: 0.10.0
libtpu: 0.0.40
codegen_flags: <defaults>
</compile_context>

<pallas_src>
import functools
import math

import jax
import jax.numpy as jnp
import numpy as np
from jax.experimental import pallas as pl
from jax.experimental.pallas import tpu as pltpu


def _ceil_div(a, b):
    return -(-a // b)


def _calibration_kernel(x_ref, rin_ref, o_ref, *, n_ref):
    """One lane-dense batch tile of empirical-CDF calibration.

    x_ref  : (1, TB) f32  -- TB batch elements along the lane axis
    rin_ref: (N, 1)  f32  -- sorted reference inputs (resident across the grid)
    o_ref  : (1, TB) f32
    """
    x = x_ref[...]                                     # (1, TB)
    rin = rin_ref[...]                                 # (N, 1)
    tb = x.shape[-1]

    neg_inf = jnp.float32(-jnp.inf)
    pos_inf = jnp.float32(jnp.inf)
    inv_nm1 = jnp.float32(1.0 / (n_ref - 1))           # reference_outputs step

    # Broadcast the reference column across lanes once, reuse three times
    # (JAX does not CSE broadcast_in_dim — hoist it).
    rin_b = jnp.broadcast_to(rin, (n_ref, tb))         # (N, TB)

    le = rin_b <= x                                    # (N, TB) mask

    # Largest reference input <= x   (== reference_inputs[idx-1])
    lo_in = jnp.max(jnp.where(le, rin_b, neg_inf), axis=0, keepdims=True)
    # Smallest reference input  > x  (== reference_inputs[idx]); reuse `le`.
    hi_in = jnp.min(jnp.where(le, pos_inf, rin_b), axis=0, keepdims=True)
    # Number of reference inputs <= x (== idx).  Since reference_outputs is
    # exactly arange(N)/(N-1), the output "gather" is pure arithmetic on cnt.
    cnt = jnp.sum(le.astype(jnp.float32), axis=0, keepdims=True)

    lo_out = (cnt - 1.0) * inv_nm1                     # reference_outputs[idx-1]
    m = inv_nm1 / (hi_in - lo_in)                      # slope (denom > 0: sorted refs)
    interp = lo_out + m * (x - lo_in)

    first_in = rin[0:1, 0:1]                           # (1, 1)
    last_in = rin[n_ref - 1:n_ref, 0:1]                # (1, 1)

    # Boundary clamps (reference_outputs[0] == 0, reference_outputs[-1] == 1).
    # Inf/NaN produced in the interp branch at the boundaries is discarded by
    # the selects (forward-only; a custom VJP would need an epsilon guard).
    out = jnp.where(
        x >= last_in, jnp.float32(1.0),
        jnp.where(x <= first_in, jnp.float32(0.0), interp),
    )
    o_ref[...] = out


@functools.partial(jax.jit, static_argnames=("tb",))
def calibration_forward(x, reference_inputs, *, tb=1024):
    """x: (B, 1) f32;  reference_inputs: (N,) f32, sorted ascending.

    reference_outputs is not taken: the module always builds it as
    arange(N)/(N-1), which the kernel exploits analytically.
    """
    if x.ndim != 2 or x.shape[1] != 1:
        raise ValueError("The dimension of the input must be equal to 2, shape (batch, 1)")
    N = int(reference_inputs.shape[0])
    if N < 2:
        raise ValueError("Need at least 2 reference inputs (N-1 division)")
    B = int(x.shape[0])

    # Lane-dense layout: batch on the lane axis, padded to a multiple of 128.
    TB = min(int(tb), 128 * _ceil_div(B, 128))
    TB = max(128, 128 * _ceil_div(TB, 128))
    num_tiles = _ceil_div(B, TB)
    Bp = num_tiles * TB

    xf = x.astype(jnp.float32).reshape(B)
    xp = jnp.pad(xf, (0, Bp - B)).reshape(num_tiles, 1, TB)
    rin = reference_inputs.astype(jnp.float32).reshape(N, 1)

    out = pl.pallas_call(
        functools.partial(_calibration_kernel, n_ref=N),
        out_shape=jax.ShapeDtypeStruct((num_tiles, 1, TB), jnp.float32),
        grid=(num_tiles,),
        in_specs=[
            pl.BlockSpec((None, 1, TB), lambda i: (i, 0, 0)),   # x tile (lane-dense)
            pl.BlockSpec((N, 1), lambda i: (0, 0)),             # refs stay resident
        ],
        out_specs=pl.BlockSpec((None, 1, TB), lambda i: (i, 0, 0)),
        compiler_params=pltpu.CompilerParams(
            dimension_semantics=("parallel",)),                 # megacore on v7x
    )(xp, rin)
    return out.reshape(Bp)[:B].reshape(B, 1)


def build_reference_tables(raw_reference_inputs, subsample=8):
    """Mirror of CalibrationLayer.__init__ (sort + block-mean subsample)."""
    ref = jnp.sort(raw_reference_inputs.flatten())
    if subsample:
        n_blocks = int(math.ceil(ref.shape[0] / subsample))
        blocks = [ref[i * subsample:(i + 1) * subsample].mean()
                  for i in range(n_blocks)]
        ref = jnp.stack(blocks)
    n = ref.shape[0]
    ref_out = jnp.arange(0, n, dtype=jnp.float32) / (n - 1)
    return ref.astype(jnp.float32), ref_out


def _reference_forward_np(x, rin, rout):
    """Pure-numpy transcription of the PyTorch forward (ground truth)."""
    x = np.asarray(x, np.float32)
    rin = np.asarray(rin, np.float32)
    rout = np.asarray(rout, np.float32)
    out = np.zeros_like(x)
    for i in range(x.shape[0]):
        xi = x[i, 0]
        if xi >= rin[-1]:
            out[i, 0] = rout[-1]
        elif xi <= rin[0]:
            out[i, 0] = rout[0]
        else:
            idx = int(np.argmax(rin > xi))
            m = (rout[idx] - rout[idx - 1]) / (rin[idx] - rin[idx - 1])
            out[i, 0] = rout[idx - 1] + m * (xi - rin[idx - 1])
    return out


if __name__ == "__main__":
    key = jax.random.PRNGKey(0)
    k_ref, k_x1, k_x2 = jax.random.split(key, 3)

    # 1024 synthetic "model outputs" -> sort + subsample(8) -> 128 reference pts
    raw_ref = jax.random.uniform(k_ref, (1024,), dtype=jnp.float32)
    ref_in, ref_out = build_reference_tables(raw_ref, subsample=8)

    # Small batch: random queries plus exact-reference / out-of-range edge cases.
    rand_x = jax.random.uniform(k_x1, (8,), dtype=jnp.float32,
                                minval=-0.1, maxval=1.1)
    edge_x = jnp.array([ref_in[0], ref_in[-1], ref_in[5], -1.0, 2.0],
                       dtype=jnp.float32)
    x_small = jnp.concatenate([rand_x, edge_x]).reshape(-1, 1)       # (13, 1)

    y = jax.block_until_ready(calibration_forward(x_small, ref_in))
    y_ref = _reference_forward_np(np.asarray(x_small), np.asarray(ref_in),
                                  np.asarray(ref_out))
    np.testing.assert_allclose(np.asarray(y), y_ref, rtol=1e-5, atol=1e-5)

    # Exercise the multi-tile grid path (padding + pipelined batch tiles).
    x_big = jax.random.uniform(k_x2, (300, 1), dtype=jnp.float32,
                               minval=-0.1, maxval=1.1)
    y2 = jax.block_until_ready(calibration_forward(x_big, ref_in, tb=128))
    y2_ref = _reference_forward_np(np.asarray(x_big), np.asarray(ref_in),
                                   np.asarray(ref_out))
    np.testing.assert_allclose(np.asarray(y2), y2_ref, rtol=1e-5, atol=1e-5)

    print("KERNEL_OK")
</pallas_src>

<mosaic_0001>
module attributes {stable_mosaic.version = 11 : i64} {
  func.func @_calibration_kernel(%arg0: i32, %arg1: memref<1x1x128xf32, #tpu.memory_space<vmem>>, %arg2: memref<128x1xf32, #tpu.memory_space<vmem>>, %arg3: memref<1x1x128xf32, #tpu.memory_space<vmem>>) attributes {dimension_semantics = [#tpu.dimension_semantics<parallel>], iteration_bounds = array<i64: 1>, scalar_prefetch = 0 : i64, scratch_operands = 0 : i64, tpu.core_type = #tpu.core_type<tc>, window_params = [{transform_indices = @transform_0, window_bounds = array<i64: 1, 1, 128>}, {pipeline_mode = #tpu.pipeline_mode<synchronous>, transform_indices = @transform_1, window_bounds = array<i64: 128, 1>}, {transform_indices = @transform_2, window_bounds = array<i64: 1, 1, 128>}]} {
    %c0 = arith.constant 0 : index
    %c0_0 = arith.constant 0 : index
    %c0_1 = arith.constant 0 : index
    %0 = vector.load %arg1[%c0, %c0_0, %c0_1] : memref<1x1x128xf32, #tpu.memory_space<vmem>>, vector<1x1x128xf32>
    %1 = vector.shape_cast %0 : vector<1x1x128xf32> to vector<1x128xf32>
    %c0_2 = arith.constant 0 : index
    %c0_3 = arith.constant 0 : index
    %2 = vector.load %arg2[%c0_2, %c0_3] : memref<128x1xf32, #tpu.memory_space<vmem>>, vector<128x1xf32>
    %3 = vector.shape_cast %2 : vector<128x1xf32> to vector<128x1xf32>
    %4 = vector.broadcast %3 : vector<128x1xf32> to vector<128x128xf32>
    %5 = vector.broadcast %1 : vector<1x128xf32> to vector<128x128xf32>
    %6 = arith.cmpf ole, %4, %5 : vector<128x128xf32>
    %cst = arith.constant 0xFF800000 : f32
    %7 = vector.broadcast %cst : f32 to vector<128x128xf32>
    %8 = arith.select %6, %4, %7 : vector<128x128xi1>, vector<128x128xf32>
    %cst_4 = arith.constant dense<0xFF800000> : vector<128xf32>
    %9 = vector.multi_reduction <maximumf>, %8, %cst_4 [0] : vector<128x128xf32> to vector<128xf32>
    %10 = vector.shape_cast %9 : vector<128xf32> to vector<1x128xf32>
    %cst_5 = arith.constant 0x7F800000 : f32
    %11 = vector.broadcast %cst_5 : f32 to vector<128x128xf32>
    %12 = arith.select %6, %11, %4 : vector<128x128xi1>, vector<128x128xf32>
    %cst_6 = arith.constant dense<0x7F800000> : vector<128xf32>
    %13 = vector.multi_reduction <minimumf>, %12, %cst_6 [0] : vector<128x128xf32> to vector<128xf32>
    %14 = vector.shape_cast %13 : vector<128xf32> to vector<1x128xf32>
    %15 = arith.extui %6 : vector<128x128xi1> to vector<128x128xi32>
    %16 = arith.sitofp %15 : vector<128x128xi32> to vector<128x128xf32>
    %cst_7 = arith.constant dense<0.000000e+00> : vector<128xf32>
    %17 = vector.multi_reduction <add>, %16, %cst_7 [0] : vector<128x128xf32> to vector<128xf32>
    %18 = vector.shape_cast %17 : vector<128xf32> to vector<1x128xf32>
    %cst_8 = arith.constant 1.000000e+00 : f32
    %19 = vector.broadcast %cst_8 : f32 to vector<1x128xf32>
    %20 = arith.subf %18, %19 : vector<1x128xf32>
    %cst_9 = arith.constant 0.00787401571 : f32
    %21 = vector.broadcast %cst_9 : f32 to vector<1x128xf32>
    %22 = arith.mulf %20, %21 : vector<1x128xf32>
    %23 = arith.subf %14, %10 : vector<1x128xf32>
    %cst_10 = arith.constant 0.00787401571 : f32
    %24 = vector.broadcast %cst_10 : f32 to vector<1x128xf32>
    %25 = arith.divf %24, %23 : vector<1x128xf32>
    %26 = arith.subf %1, %10 : vector<1x128xf32>
    %27 = arith.mulf %25, %26 : vector<1x128xf32>
    %28 = arith.addf %22, %27 : vector<1x128xf32>
    %29 = vector.extract_strided_slice %2 {offsets = [0, 0], sizes = [1, 1], strides = [1, 1]} : vector<128x1xf32> to vector<1x1xf32>
    %30 = vector.extract_strided_slice %2 {offsets = [127, 0], sizes = [1, 1], strides = [1, 1]} : vector<128x1xf32> to vector<1x1xf32>
    %31 = vector.broadcast %30 : vector<1x1xf32> to vector<1x128xf32>
    %32 = arith.cmpf oge, %1, %31 : vector<1x128xf32>
    %33 = vector.broadcast %29 : vector<1x1xf32> to vector<1x128xf32>
    %34 = arith.cmpf ole, %1, %33 : vector<1x128xf32>
    %cst_11 = arith.constant 0.000000e+00 : f32
    %35 = vector.broadcast %cst_11 : f32 to vector<1x128xf32>
    %36 = arith.select %34, %35, %28 : vector<1x128xi1>, vector<1x128xf32>
    %cst_12 = arith.constant 1.000000e+00 : f32
    %37 = vector.broadcast %cst_12 : f32 to vector<1x128xf32>
    %38 = arith.select %32, %37, %36 : vector<1x128xi1>, vector<1x128xf32>
    %c0_13 = arith.constant 0 : index
    %c0_14 = arith.constant 0 : index
    %c0_15 = arith.constant 0 : index
    %39 = vector.load %arg3[%c0_13, %c0_14, %c0_15] : memref<1x1x128xf32, #tpu.memory_space<vmem>>, vector<1x1x128xf32>
    %40 = vector.shape_cast %39 : vector<1x1x128xf32> to vector<1x128xf32>
    %41 = vector.shape_cast %38 : vector<1x128xf32> to vector<1x1x128xf32>
    tpu.vector_store %arg3[%c0_13, %c0_14, %c0_15], %41 {strides = array<i32>} : memref<1x1x128xf32, #tpu.memory_space<vmem>>, vector<1x1x128xf32>,
    return
  }
  func.func @transform_0(%arg0: i32) -> (i32, i32, i32) {
    %c0_i32 = arith.constant 0 : i32
    %c0_i32_0 = arith.constant 0 : i32
    %c0_i32_1 = arith.constant 0 : i32
    return %arg0, %c0_i32, %c0_i32_0 : i32, i32, i32
  }
  func.func @transform_1(%arg0: i32) -> (i32, i32) {
    %c0_i32 = arith.constant 0 : i32
    %c0_i32_0 = arith.constant 0 : i32
    %c0_i32_1 = arith.constant 0 : i32
    return %c0_i32, %c0_i32_0 : i32, i32
  }
  func.func @transform_2(%arg0: i32) -> (i32, i32, i32) {
    %c0_i32 = arith.constant 0 : i32
    %c0_i32_0 = arith.constant 0 : i32
    %c0_i32_1 = arith.constant 0 : i32
    return %arg0, %c0_i32, %c0_i32_0 : i32, i32, i32
  }
}

</mosaic_0001>

<llo_original>
// kernel: calibration_forward.1
$region0: #{calibration_forward.1}
  #allocation0 [shape = 'u32[]', space=smem, size = 0x4, offset = 0x4, fixed_abs, tag = 'smem constant byte address 0x4 - core index']
  #allocation1 [shape = 'u32[144,128]{1,0:T(1,128)}', space=vmem, size = 0x12000, scoped, tag = 'internal scratch']
  %s0 = inlined_call_operand.vmem [shape: f32[1,1,128], index: 0, kind: input, shape index: {}]
  %s1 = inlined_call_operand.vmem [shape: f32[128,1], index: 1, kind: input, shape index: {}]
  %s2 = inlined_call_operand.vmem [shape: f32[1,1,128], index: 2, kind: output, shape index: {}]
  %s3 = sld [smem:[#allocation0]]
  $region18: #{calibration_forward.1} parent=0
    _
  %s5 = ssub.s32 1, %s3
  %s6 = scalar_select 0, %s5, %s3
  // Predicated region
  $region2: #{calibration_forward.1} parent=0 // pred_check
    _
  $region3: #{calibration_forward.1} parent=0 // pred_check_branch
    %8 = sbr.rel (0) target = $region5
  $region4: #{calibration_forward.1} parent=0 // pred_region
    _
  $region5: #{calibration_forward.1} parent=0 // pred_fallthru
    _
  // Predicated region
  $region6: #{calibration_forward.1} parent=0 // pred_check
    _
  $region7: #{calibration_forward.1} parent=0 // pred_check_branch
    %10 = sbr.rel (0) target = $region9
  $region8: #{calibration_forward.1} parent=0 // pred_region
    _
  $region9: #{calibration_forward.1} parent=0 // pred_fallthru
    _
  %v11 = vld [vmem:[%s0] sm:$0x1]
  %v12 = vld [vmem:[%s1] sm:$0xff]
  %v13 = vld [vmem:[%s1 + $0x8] sm:$0xff]
  %v14 = vld [vmem:[%s1 + $0x10] sm:$0xff]
  %v15 = vld [vmem:[%s1 + $0x18] sm:$0xff]
  %v16 = vld [vmem:[%s1 + $0x20] sm:$0xff]
  %v17 = vld [vmem:[%s1 + $0x28] sm:$0xff]
  %v18 = vld [vmem:[%s1 + $0x30] sm:$0xff]
  %v19 = vld [vmem:[%s1 + $0x38] sm:$0xff]
  %v20 = vld [vmem:[%s1 + $0x40] sm:$0xff]
  %v21 = vld [vmem:[%s1 + $0x48] sm:$0xff]
  %v22 = vld [vmem:[%s1 + $0x50] sm:$0xff]
  %v23 = vld [vmem:[%s1 + $0x58] sm:$0xff]
  %v24 = vld [vmem:[%s1 + $0x60] sm:$0xff]
  %v25 = vld [vmem:[%s1 + $0x68] sm:$0xff]
  %v26 = vld [vmem:[%s1 + $0x70] sm:$0xff]
  %v27 = vld [vmem:[%s1 + $0x78] sm:$0xff]
  %29 = vset.pattern.permute.xlu0 0
  %30 = vperm.xlu0 %29, %v12
  %v31 = vpop.permute.xlu0 %30
  %34 = vset.pattern.permute.xlu0 0
  %35 = vperm.xlu0 %34, %v13
  %v36 = vpop.permute.xlu0 %35
  %39 = vset.pattern.permute.xlu0 0
  %40 = vperm.xlu0 %39, %v14
  %v41 = vpop.permute.xlu0 %40
  %44 = vset.pattern.permute.xlu0 0
  %45 = vperm.xlu0 %44, %v15
  %v46 = vpop.permute.xlu0 %45
  %49 = vset.pattern.permute.xlu0 0
  %50 = vperm.xlu0 %49, %v16
  %v51 = vpop.permute.xlu0 %50
  %54 = vset.pattern.permute.xlu0 0
  %55 = vperm.xlu0 %54, %v17
  %v56 = vpop.permute.xlu0 %55
  %59 = vset.pattern.permute.xlu0 0
  %60 = vperm.xlu0 %59, %v18
  %v61 = vpop.permute.xlu0 %60
  %64 = vset.pattern.permute.xlu0 0
  %65 = vperm.xlu0 %64, %v19
  %v66 = vpop.permute.xlu0 %65
  %69 = vset.pattern.permute.xlu0 0
  %70 = vperm.xlu0 %69, %v20
  %v71 = vpop.permute.xlu0 %70
  %74 = vset.pattern.permute.xlu0 0
  %75 = vperm.xlu0 %74, %v21
  %v76 = vpop.permute.xlu0 %75
  %79 = vset.pattern.permute.xlu0 0
  %80 = vperm.xlu0 %79, %v22
  %v81 = vpop.permute.xlu0 %80
  %84 = vset.pattern.permute.xlu0 0
  %85 = vperm.xlu0 %84, %v23
  %v86 = vpop.permute.xlu0 %85
  %89 = vset.pattern.permute.xlu0 0
  %90 = vperm.xlu0 %89, %v24
  %v91 = vpop.permute.xlu0 %90
  %94 = vset.pattern.permute.xlu0 0
  %95 = vperm.xlu0 %94, %v25
  %v96 = vpop.permute.xlu0 %95
  %99 = vset.pattern.permute.xlu0 0
  %100 = vperm.xlu0 %99, %v26
  %v101 = vpop.permute.xlu0 %100
  %104 = vset.pattern.permute.xlu0 0
  %105 = vperm.xlu0 %104, %v27
  %v106 = vpop.permute.xlu0 %105
  %v109 = vlaneseq
  %v110 = vshrl.u32 %v109, 7
  %v111 = vsub.s32 0, %v110
  %v112 = vrot.slane %v11, %v111
  %vm114 = vcmp.le.f32.partialorder %v31, %v112
  %vm115 = vcmp.le.f32.partialorder %v36, %v112
  %vm116 = vcmp.le.f32.partialorder %v41, %v112
  %vm117 = vcmp.le.f32.partialorder %v46, %v112
  %vm118 = vcmp.le.f32.partialorder %v51, %v112
  %vm119 = vcmp.le.f32.partialorder %v56, %v112
  %vm120 = vcmp.le.f32.partialorder %v61, %v112
  %vm121 = vcmp.le.f32.partialorder %v66, %v112
  %vm122 = vcmp.le.f32.partialorder %v71, %v112
  %vm123 = vcmp.le.f32.partialorder %v76, %v112
  %vm124 = vcmp.le.f32.partialorder %v81, %v112
  %vm125 = vcmp.le.f32.partialorder %v86, %v112
  %vm126 = vcmp.le.f32.partialorder %v91, %v112
  %vm127 = vcmp.le.f32.partialorder %v96, %v112
  %vm128 = vcmp.le.f32.partialorder %v101, %v112
  %vm129 = vcmp.le.f32.partialorder %v106, %v112
  %v130 = vsel %vm114, %v31, -inf
  %v131 = vsel %vm115, %v36, -inf
  %v132 = vsel %vm116, %v41, -inf
  %v133 = vsel %vm117, %v46, -inf
  %v134 = vsel %vm118, %v51, -inf
  %v135 = vsel %vm119, %v56, -inf
  %v136 = vsel %vm120, %v61, -inf
  %v137 = vsel %vm121, %v66, -inf
  %v138 = vsel %vm122, %v71, -inf
  %v139 = vsel %vm123, %v76, -inf
  %v140 = vsel %vm124, %v81, -inf
  %v141 = vsel %vm125, %v86, -inf
  %v142 = vsel %vm126, %v91, -inf
  %v143 = vsel %vm127, %v96, -inf
  %v144 = vsel %vm128, %v101, -inf
  %v145 = vsel %vm129, %v106, -inf
  %v146 = vmax.f32 %v130, %v134
  %v147 = vmax.f32 %v131, %v135
  %v148 = vmax.f32 %v132, %v136
  %v149 = vmax.f32 %v133, %v137
  %v150 = vmax.f32 %v146, %v138
  %v151 = vmax.f32 %v147, %v139
  %v152 = vmax.f32 %v148, %v140
  %v153 = vmax.f32 %v149, %v141
  %v154 = vmax.f32 %v150, %v142
  %v155 = vmax.f32 %v151, %v143
  %v156 = vmax.f32 %v152, %v144
  %v157 = vmax.f32 %v153, %v145
  %v158 = vmax.f32 %v154, %v155
  %v159 = vmax.f32 %v156, %v157
  %v160 = vmax.f32 %v158, %v159
  %v161 = vrot.slane %v160, 4
  %v162 = vmax.f32 %v160, %v161
  %v163 = vrot.slane %v162, 2
  %v164 = vmax.f32 %v162, %v163
  %v165 = vrot.slane %v164, 1
  %v166 = vmax.f32 %v164, %v165
  %v167 = vsel %vm114, inf, %v31
  %v168 = vsel %vm115, inf, %v36
  %v169 = vsel %vm116, inf, %v41
  %v170 = vsel %vm117, inf, %v46
  %v171 = vsel %vm118, inf, %v51
  %v172 = vsel %vm119, inf, %v56
  %v173 = vsel %vm120, inf, %v61
  %v174 = vsel %vm121, inf, %v66
  %v175 = vsel %vm122, inf, %v71
  %v176 = vsel %vm123, inf, %v76
  %v177 = vsel %vm124, inf, %v81
  %v178 = vsel %vm125, inf, %v86
  %v179 = vsel %vm126, inf, %v91
  %v180 = vsel %vm127, inf, %v96
  %v181 = vsel %vm128, inf, %v101
  %v182 = vsel %vm129, inf, %v106
  %v183 = vmin.f32 %v167, %v171
  %v184 = vmin.f32 %v168, %v172
  %v185 = vmin.f32 %v169, %v173
  %v186 = vmin.f32 %v170, %v174
  %v187 = vmin.f32 %v183, %v175
  %v188 = vmin.f32 %v184, %v176
  %v189 = vmin.f32 %v185, %v177
  %v190 = vmin.f32 %v186, %v178
  %v191 = vmin.f32 %v187, %v179
  %v192 = vmin.f32 %v188, %v180
  %v193 = vmin.f32 %v189, %v181
  %v194 = vmin.f32 %v190, %v182
  %v195 = vmin.f32 %v191, %v192
  %v196 = vmin.f32 %v193, %v194
  %v197 = vmin.f32 %v195, %v196
  %v198 = vrot.slane %v197, 4
  %v199 = vmin.f32 %v197, %v198
  %v200 = vrot.slane %v199, 2
  %v201 = vmin.f32 %v199, %v200
  %v202 = vrot.slane %v201, 1
  %v203 = vmin.f32 %v201, %v202
  %v204 = vsel %vm114, 1, 0
  %v205 = vsel %vm115, 1, 0
  %v206 = vsel %vm116, 1, 0
  %v207 = vsel %vm117, 1, 0
  %v208 = vsel %vm118, 1, 0
  %v209 = vsel %vm119, 1, 0
  %v210 = vsel %vm120, 1, 0
  %v211 = vsel %vm121, 1, 0
  %v212 = vsel %vm122, 1, 0
  %v213 = vsel %vm123, 1, 0
  %v214 = vsel %vm124, 1, 0
  %v215 = vsel %vm125, 1, 0
  %v216 = vsel %vm126, 1, 0
  %v217 = vsel %vm127, 1, 0
  %v218 = vsel %vm128, 1, 0
  %v219 = vsel %vm129, 1, 0
  %v220 = vcvt.s32.f32 %v204
  %v221 = vcvt.s32.f32 %v205
  %v222 = vcvt.s32.f32 %v206
  %v223 = vcvt.s32.f32 %v207
  %v224 = vcvt.s32.f32 %v208
  %v225 = vcvt.s32.f32 %v209
  %v226 = vcvt.s32.f32 %v210
  %v227 = vcvt.s32.f32 %v211
  %v228 = vcvt.s32.f32 %v212
  %v229 = vcvt.s32.f32 %v213
  %v230 = vcvt.s32.f32 %v214
  %v231 = vcvt.s32.f32 %v215
  %v232 = vcvt.s32.f32 %v216
  %v233 = vcvt.s32.f32 %v217
  %v234 = vcvt.s32.f32 %v218
  %v235 = vcvt.s32.f32 %v219
  %v236 = vadd.f32 %v220, %v221
  %v237 = vadd.f32 %v236, %v222
  %v238 = vadd.f32 %v237, %v223
  %v239 = vadd.f32 %v238, %v224
  %v240 = vadd.f32 %v239, %v225
  %v241 = vadd.f32 %v240, %v226
  %v242 = vadd.f32 %v241, %v227
  %v243 = vadd.f32 %v242, %v228
  %v244 = vadd.f32 %v243, %v229
  %v245 = vadd.f32 %v244, %v230
  %v246 = vadd.f32 %v245, %v231
  %v247 = vadd.f32 %v246, %v232
  %v248 = vadd.f32 %v247, %v233
  %v249 = vadd.f32 %v248, %v234
  %v250 = vadd.f32 %v249, %v235
  %v251 = vrot.slane %v250, 4
  %v252 = vadd.f32 %v250, %v251
  %v253 = vrot.slane %v252, 2
  %v254 = vadd.f32 %v252, %v253
  %v255 = vrot.slane %v254, 1
  %v256 = vadd.f32 %v254, %v255
  %v257 = vsub.f32 %v256, 1.0
  %v258 = vmul.f32 %v257, 0.007874016
  %v259 = vsub.f32 %v203, %v166
  %v260 = vrcp.pop %v259
  %v261 = vmul.f32 0.007874016, %v260
  %v262 = vsub.f32 %v11, %v166
  %v263 = vmul.f32 %v261, %v262
  %v264 = vadd.f32 %v258, %v263
  %v265 = vlaneseq
  %v266 = vshrl.u32 %v265, 7
  %v267 = vsub.s32 7, %v266
  %v268 = vrot.slane %v106, %v267
  %vm270 = vcmp.ge.f32.partialorder %v11, %v268
  %vm271 = vcmp.le.f32.partialorder %v11, %v31
  %v272 = vsel %vm271, 0.0, %v264
  %v273 = vsel %vm270, 1.0, %v272
  %274 = vst [vmem:[%s2] sm:$0x1] %v273
  // Predicated region
  $region10: #{calibration_forward.1} parent=0 // pred_check
    _
  $region11: #{calibration_forward.1} parent=0 // pred_check_branch
    %276 = sbr.rel (0) target = $region13
  $region12: #{calibration_forward.1} parent=0 // pred_region
    _
  $region13: #{calibration_forward.1} parent=0 // pred_fallthru
    _
  // Predicated region
  $region14: #{calibration_forward.1} parent=0 // pred_check
    _
  $region15: #{calibration_forward.1} parent=0 // pred_check_branch
    %278 = sbr.rel (0) target = $region17
  $region16: #{calibration_forward.1} parent=0 // pred_region
    _
  $region17: #{calibration_forward.1} parent=0 // pred_fallthru
    _

</llo_original>
